<compile_context>
chip_gen: v6e
topology: v6e:2x2x1
jax: 0.10.0
libtpu: 0.0.40
codegen_flags: <defaults>
</compile_context>

<pallas_src>
import functools
import math

import jax
import jax.numpy as jnp
from jax.experimental import pallas as pl
from jax.experimental.pallas import tpu as pltpu


def _round_up(x, m):
    return ((x + m - 1) // m) * m


def _cdiv(a, b):
    return -(-a // b)


# ----------------------------------------------------------------------------
# Kernel 1: LoRA merge   merged = base + (scale*lora_B) @ lora_A    (f32)
#   base_flat (O*k, C*k)  lora_B_scaled (O*k, r*k)  lora_A (r*k, C*k)
#   Row-tiled, "parallel" grid.  scale is folded into lora_B in XLA so the
#   kernel has no closed-over (possibly traced) scalar.
# ----------------------------------------------------------------------------
def _lora_merge_kernel(base_ref, b_ref, a_ref, o_ref):
    delta = jnp.dot(b_ref[...], a_ref[...], preferred_element_type=jnp.float32)
    o_ref[...] = (base_ref[...].astype(jnp.float32) + delta).astype(o_ref.dtype)


def lora_merge(base_flat, lora_B_scaled, lora_A):
    Ok, Ck = base_flat.shape
    rk = lora_A.shape[0]
    tr = min(_round_up(Ok, 8), 256)                  # row tile
    Okp = _round_up(Ok, tr)
    if Okp != Ok:
        base_flat = jnp.pad(base_flat, ((0, Okp - Ok), (0, 0)))
        lora_B_scaled = jnp.pad(lora_B_scaled, ((0, Okp - Ok), (0, 0)))
    out = pl.pallas_call(
        _lora_merge_kernel,
        out_shape=jax.ShapeDtypeStruct((Okp, Ck), jnp.float32),
        grid=(Okp // tr,),
        in_specs=[
            pl.BlockSpec((tr, Ck), lambda i: (i, 0)),
            pl.BlockSpec((tr, rk), lambda i: (i, 0)),
            pl.BlockSpec((rk, Ck), lambda i: (0, 0)),
        ],
        out_specs=pl.BlockSpec((tr, Ck), lambda i: (i, 0)),
        compiler_params=pltpu.CompilerParams(dimension_semantics=("parallel",)),
    )(base_flat, lora_B_scaled, lora_A)
    return out[:Ok]


# ----------------------------------------------------------------------------
# Kernel 2: fused im2col + conv GEMM.
#   Grid = (N, HT, OT), o innermost.  x stays in HBM (memory_space=ANY,
#   NHWC, zero-padded); a double-buffered VMEM scratch holds the current /
#   next input row window (manual DMA with cross-batch prefetch).  At o==0
#   the (th*Wo, k*k*C) im2col LHS is built once into a VMEM scratch; every
#   o-step does ONE MXU matmul (K = k*k*C) against the (k*k*C, t_o) weight
#   tile, adds the bias in f32 and stores a lane-dense bf16 block.
# ----------------------------------------------------------------------------
def _conv_fused_kernel(x_hbm, w_ref, b_ref, o_ref, xwin, lhs_ref, sem, *,
                       k, stride, th, Wo, win_h, HT, n_tiles, C):
    n = pl.program_id(0)
    i = pl.program_id(1)
    oi = pl.program_id(2)
    g = n * HT + i                       # global row-tile counter (cross-batch)
    slot = g % 2

    def window_copy(gt, s):
        # Same constructor used for .start() and .wait() (identical shapes).
        n_g = gt // HT
        row0 = (gt - n_g * HT) * (th * stride)
        row0 = pl.multiple_of(row0, th * stride)
        return pltpu.make_async_copy(
            x_hbm.at[n_g, pl.ds(row0, win_h), :, :], xwin.at[s], sem.at[s])

    @pl.when(oi == 0)
    def _():
        # Prime the very first window (only exposed DMA of the whole call).
        @pl.when(g == 0)
        def _():
            window_copy(0, 0).start()

        window_copy(g, slot).wait()

        # Prefetch the next window (including the next batch's first tile)
        # while this one is being consumed.
        @pl.when(g + 1 < n_tiles)
        def _():
            window_copy(g + 1, 1 - slot).start()

        # Build the (th*Wo, k*k*C) im2col LHS once per (n, i); reused for all
        # output-channel tiles.  Column order (dh, dw, c) matches w_ref rows.
        xv = xwin[slot]                                        # (win_h, Wp, C)
        for dh in range(k):
            for dw in range(k):
                patch = jax.lax.slice(
                    xv,
                    (dh, dw, 0),
                    (dh + (th - 1) * stride + 1,
                     dw + (Wo - 1) * stride + 1, C),
                    strides=(stride, stride, 1))               # (th, Wo, C)
                j = (dh * k + dw) * C
                lhs_ref[:, j:j + C] = patch.reshape(th * Wo, C)

    # Single MXU GEMM with K = k*k*C; accumulation stays on the MXU.
    acc = jnp.dot(lhs_ref[...], w_ref[...], preferred_element_type=jnp.float32)
    o_ref[0] = (acc + b_ref[...]).astype(o_ref.dtype)


# ----------------------------------------------------------------------------
# Wrapper: full LoRA_Conv2d forward (NCHW in / NCHW out by default)
# ----------------------------------------------------------------------------
def lora_conv2d_forward(x, base_w, base_b, lora_A, lora_B, scale,
                        stride=1, padding=1, tile_m=1024,
                        compute_dtype=jnp.bfloat16, out_dtype=None,
                        vmem_budget_bytes=40 * 1024 * 1024,
                        nchw_output=True):
    if out_dtype is None:
        out_dtype = compute_dtype
    N, C, H, W = x.shape
    O, Ci, kh, kw = base_w.shape
    assert Ci == C and kh == kw, "square kernel, groups=1, dilation=1 only"
    k = kh

    # ---- LoRA-merged weight in f32 (Pallas kernel 1) ----------------------
    merged_flat = lora_merge(
        base_w.reshape(O * k, C * k).astype(jnp.float32),
        (scale * lora_B).astype(jnp.float32),
        lora_A.astype(jnp.float32))
    merged = merged_flat.reshape(O, C, k, k)          # same as torch .view

    # ---- output geometry / tiling -----------------------------------------
    Ho = (H + 2 * padding - k) // stride + 1
    Wo = (W + 2 * padding - k) // stride + 1
    Op = _round_up(O, 128)                            # lane-dense output dim
    KK = k * k * C
    Wp = W + 2 * padding
    out_bytes = jnp.dtype(out_dtype).itemsize
    cmp_bytes = jnp.dtype(compute_dtype).itemsize

    g16 = 16 // math.gcd(Wo, 16)                      # keeps th*Wo % 16 == 0
    th = max(1, min(tile_m // max(Wo, 1), Ho))
    th = _round_up(th, g16)

    def vmem_use(th_, t_o_):
        m = th_ * Wo
        wh = (th_ - 1) * stride + k
        return (2 * wh * Wp * C * cmp_bytes                # xwin double buffer
                + m * _round_up(KK, 128) * cmp_bytes       # im2col LHS scratch
                + 2 * KK * t_o_ * cmp_bytes                # weight (2 pipe bufs)
                + 2 * m * t_o_ * out_bytes                 # output (2 pipe bufs)
                + 2 * t_o_ * 4)                            # bias

    # Pick the largest output-channel tile (multiple of 128, divisor of Op)
    # that fits the VMEM budget; then shrink the row tile if still too big.
    t_o = 128
    for m_ in range(Op // 128, 0, -1):
        cand = m_ * 128
        if Op % cand == 0:
            t_o = cand
            if vmem_use(th, t_o) <= vmem_budget_bytes:
                break
    while vmem_use(th, t_o) > vmem_budget_bytes and th > g16:
        th = max(g16, ((th // 2) // g16) * g16)

    HT = _cdiv(Ho, th)
    Ho_p = HT * th
    OT = Op // t_o
    win_h = (th - 1) * stride + k
    M = th * Wo

    # ---- input: NHWC, zero padded (conv pad + bottom pad for last tile) ----
    hp_needed = (Ho_p - 1) * stride + k
    extra_h = max(0, hp_needed - (H + 2 * padding))
    x_nhwc = jnp.pad(
        x.transpose(0, 2, 3, 1),
        ((0, 0), (padding, padding + extra_h), (padding, padding), (0, 0)),
    ).astype(compute_dtype)

    # ---- weight (k*k*C, Op), rows ordered (dh, dw, c); bias (1, Op) f32 ----
    w2d = merged.transpose(2, 3, 1, 0).reshape(KK, O)
    w2d = jnp.pad(w2d, ((0, 0), (0, Op - O))).astype(compute_dtype)
    bias2d = jnp.pad(base_b.astype(jnp.float32), (0, Op - O)).reshape(1, Op)

    vmem_limit = int(min(max(1.5 * vmem_use(th, t_o), 32 * 1024 * 1024),
                         56 * 1024 * 1024))
    kernel = functools.partial(_conv_fused_kernel, k=k, stride=stride, th=th,
                               Wo=Wo, win_h=win_h, HT=HT, n_tiles=N * HT, C=C)

    out_flat = pl.pallas_call(
        kernel,
        out_shape=jax.ShapeDtypeStruct((N, Ho_p * Wo, Op), out_dtype),
        grid_spec=pltpu.PrefetchScalarGridSpec(
            num_scalar_prefetch=0,
            grid=(N, HT, OT),
            in_specs=[
                pl.BlockSpec(memory_space=pl.ANY),               # x stays in HBM
                pl.BlockSpec((KK, t_o), lambda n, i, o: (0, o)),  # weight tile
                pl.BlockSpec((1, t_o), lambda n, i, o: (0, o)),   # bias tile
            ],
            out_specs=pl.BlockSpec((1, M, t_o), lambda n, i, o: (n, i, o)),
            scratch_shapes=[
                pltpu.VMEM((2, win_h, Wp, C), compute_dtype),     # input window
                pltpu.VMEM((M, KK), compute_dtype),               # im2col LHS
                pltpu.SemaphoreType.DMA((2,)),
            ],
        ),
        compiler_params=pltpu.CompilerParams(
            # Sequential grid: required by the cross-batch prefetch (g = n*HT+i).
            dimension_semantics=("arbitrary", "arbitrary", "arbitrary"),
            vmem_limit_bytes=vmem_limit,
        ),
    )(x_nhwc, w2d, bias2d)

    out = out_flat.reshape(N, Ho_p, Wo, Op)[:, :Ho, :, :O]       # NHWC
    if nchw_output:
        out = out.transpose(0, 3, 1, 2)                          # NCHW
    return out


# ----------------------------------------------------------------------------
# Demo / self-check
# ----------------------------------------------------------------------------
if __name__ == "__main__":
    key = jax.random.PRNGKey(0)
    k_w, k_b, k_a, k_lb, k_x = jax.random.split(key, 5)

    N, C, H, W = 2, 4, 16, 16
    O, k, rank = 8, 3, 4
    scale = 2.0
    stride, padding = 1, 1

    base_w = 0.1 * jax.random.normal(k_w, (O, C, k, k), dtype=jnp.float32)
    base_b = 0.1 * jax.random.normal(k_b, (O,), dtype=jnp.float32)

    # lora_A: kaiming_uniform_(a=sqrt(rank)) bound for a 2D tensor
    fan_in = C * k
    gain = (2.0 / (1.0 + rank)) ** 0.5
    bound = gain * (3.0 / fan_in) ** 0.5
    lora_A = jax.random.uniform(k_a, (rank * k, C * k), dtype=jnp.float32,
                                minval=-bound, maxval=bound)
    # Module inits lora_B to zeros; use small non-zero values so the LoRA
    # path is actually exercised (deterministic, in-script).
    lora_B = 0.05 * jax.random.normal(k_lb, (O * k, rank * k), dtype=jnp.float32)

    x = jax.random.normal(k_x, (N, C, H, W), dtype=jnp.float32)

    out = lora_conv2d_forward(x, base_w, base_b, lora_A, lora_B, scale,
                              stride=stride, padding=padding)
    out = jax.block_until_ready(out)

    # pure-JAX f32 reference of the same forward
    merged_ref = base_w + scale * (lora_B @ lora_A).reshape(base_w.shape)
    ref = jax.lax.conv_general_dilated(
        x, merged_ref, window_strides=(stride, stride),
        padding=[(padding, padding), (padding, padding)],
        dimension_numbers=("NCHW", "OIHW", "NCHW"),
    ) + base_b[None, :, None, None]

    assert out.shape == ref.shape == (N, O, H, W)
    # bf16 GEMM operands + bf16 output with f32 accumulation -> loosened
    # tolerance vs the pure-f32 reference.
    assert jnp.allclose(out, ref, rtol=3e-2, atol=3e-2), (
        float(jnp.max(jnp.abs(out - ref))))
    print("KERNEL_OK")
</pallas_src>

<mosaic_0001>
module attributes {stable_mosaic.version = 11 : i64} {
  func.func @_lora_merge_kernel(%arg0: i32, %arg1: memref<24x12xf32, #tpu.memory_space<vmem>>, %arg2: memref<24x12xf32, #tpu.memory_space<vmem>>, %arg3: memref<12x12xf32, #tpu.memory_space<vmem>>, %arg4: memref<24x12xf32, #tpu.memory_space<vmem>>) attributes {dimension_semantics = [#tpu.dimension_semantics<parallel>], iteration_bounds = array<i64: 1>, scalar_prefetch = 0 : i64, scratch_operands = 0 : i64, tpu.core_type = #tpu.core_type<tc>, window_params = [{transform_indices = @transform_0, window_bounds = array<i64: 24, 12>}, {transform_indices = @transform_1, window_bounds = array<i64: 24, 12>}, {pipeline_mode = #tpu.pipeline_mode<synchronous>, transform_indices = @transform_2, window_bounds = array<i64: 12, 12>}, {transform_indices = @transform_3, window_bounds = array<i64: 24, 12>}]} {
    %c0 = arith.constant 0 : index
    %c0_0 = arith.constant 0 : index
    %0 = vector.load %arg2[%c0, %c0_0] : memref<24x12xf32, #tpu.memory_space<vmem>>, vector<24x12xf32>
    %c0_1 = arith.constant 0 : index
    %c0_2 = arith.constant 0 : index
    %1 = vector.load %arg3[%c0_1, %c0_2] : memref<12x12xf32, #tpu.memory_space<vmem>>, vector<12x12xf32>
    %cst = arith.constant dense<0.000000e+00> : vector<24x12xf32>
    %2 = tpu.matmul %0, %1, %cst {dimension_numbers = #tpu.dot_dimension_numbers<[1], [0], [0], [1], [0, 0, 1, 1], [], []>} : vector<24x12xf32>, vector<12x12xf32>, vector<24x12xf32> -> vector<24x12xf32>
    %c0_3 = arith.constant 0 : index
    %c0_4 = arith.constant 0 : index
    %3 = vector.load %arg1[%c0_3, %c0_4] : memref<24x12xf32, #tpu.memory_space<vmem>>, vector<24x12xf32>
    %4 = arith.addf %3, %2 : vector<24x12xf32>
    %c0_5 = arith.constant 0 : index
    %c0_6 = arith.constant 0 : index
    %5 = vector.load %arg4[%c0_5, %c0_6] : memref<24x12xf32, #tpu.memory_space<vmem>>, vector<24x12xf32>
    tpu.vector_store %arg4[%c0_5, %c0_6], %4 {strides = array<i32>} : memref<24x12xf32, #tpu.memory_space<vmem>>, vector<24x12xf32>,
    return
  }
  func.func @transform_0(%arg0: i32) -> (i32, i32) {
    %c0_i32 = arith.constant 0 : i32
    %c0_i32_0 = arith.constant 0 : i32
    return %arg0, %c0_i32 : i32, i32
  }
  func.func @transform_1(%arg0: i32) -> (i32, i32) {
    %c0_i32 = arith.constant 0 : i32
    %c0_i32_0 = arith.constant 0 : i32
    return %arg0, %c0_i32 : i32, i32
  }
  func.func @transform_2(%arg0: i32) -> (i32, i32) {
    %c0_i32 = arith.constant 0 : i32
    %c0_i32_0 = arith.constant 0 : i32
    %c0_i32_1 = arith.constant 0 : i32
    return %c0_i32, %c0_i32_0 : i32, i32
  }
  func.func @transform_3(%arg0: i32) -> (i32, i32) {
    %c0_i32 = arith.constant 0 : i32
    %c0_i32_0 = arith.constant 0 : i32
    return %arg0, %c0_i32 : i32, i32
  }
}

</mosaic_0001>

<llo_original>
// kernel: tpu_custom_call.1
$region0: #{tpu_custom_call.1}
  #allocation0 [shape = 'u32[]', space=smem, size = 0x4, offset = 0x4, fixed_abs, tag = 'smem constant byte address 0x4 - core index']
  #allocation1 [shape = 'u32[144,128]{1,0:T(1,128)}', space=vmem, size = 0x12000, scoped, tag = 'internal scratch']
  %s0 = inlined_call_operand.vmem [shape: f32[24,12], index: 0, kind: input, shape index: {}]
  %s1 = inlined_call_operand.vmem [shape: f32[24,12], index: 1, kind: input, shape index: {}]
  %s2 = inlined_call_operand.vmem [shape: f32[12,12], index: 2, kind: input, shape index: {}]
  %s3 = inlined_call_operand.vmem [shape: f32[24,12], index: 3, kind: output, shape index: {}]
  %s4 = sld [smem:[#allocation0]]
  $region22: #{tpu_custom_call.1} parent=0
    _
  %s6 = ssub.s32 1, %s4
  %s7 = scalar_select 0, %s6, %s4
  // Predicated region
  $region2: #{tpu_custom_call.1} parent=0 // pred_check
    _
  $region3: #{tpu_custom_call.1} parent=0 // pred_check_branch
    %9 = sbr.rel (0) target = $region5
  $region4: #{tpu_custom_call.1} parent=0 // pred_region
    _
  $region5: #{tpu_custom_call.1} parent=0 // pred_fallthru
    _
  // Predicated region
  $region6: #{tpu_custom_call.1} parent=0 // pred_check
    _
  $region7: #{tpu_custom_call.1} parent=0 // pred_check_branch
    %11 = sbr.rel (0) target = $region9
  $region8: #{tpu_custom_call.1} parent=0 // pred_region
    _
  $region9: #{tpu_custom_call.1} parent=0 // pred_fallthru
    _
  // Predicated region
  $region10: #{tpu_custom_call.1} parent=0 // pred_check
    _
  $region11: #{tpu_custom_call.1} parent=0 // pred_check_branch
    %13 = sbr.rel (0) target = $region13
  $region12: #{tpu_custom_call.1} parent=0 // pred_region
    _
  $region13: #{tpu_custom_call.1} parent=0 // pred_fallthru
    _
  %v14 = vld [vmem:[%s1] sm:$0xff]
  %v15 = vld [vmem:[%s1 + $0x8] sm:$0xff]
  %v16 = vld [vmem:[%s1 + $0x10] sm:$0xff]
  %v17 = vld [vmem:[%s2] sm:$0xff]
  %v18 = vld [vmem:[%s2 + $0x8] sm:$0xf]
  %vm19 = vcmask 97280
  %v21 = vsel %vm19, %v14, 0
  %v24 = vsel %vm19, %v15, 0
  %v27 = vsel %vm19, %v16, 0
  %vm29 = vcmask 1043456
  %v31 = vsel %vm29, %v18, 0
  %33 = vmatprep.subr.mxu0 0.0
  %34 = vmatpush1.msra.mxu0 0.0
  %35 = vmatprep.subr.mxu0 0.0
  %36 = vmatpush1.msra.mxu0 0.0
  %37 = vmatprep.subr.mxu0 0.0
  %38 = vmatpush1.msra.mxu0 0.0
  %39 = vmatprep.subr.mxu0 0.0
  %40 = vmatpush1.msra.mxu0 0.0
  %41 = vmatprep.subr.mxu0 0.0
  %42 = vmatpush1.msra.mxu0 0.0
  %43 = vmatprep.subr.mxu0 0.0
  %44 = vmatpush1.msra.mxu0 0.0
  %45 = vmatprep.subr.mxu0 0.0
  %46 = vmatpush1.msra.mxu0 0.0
  %47 = vmatprep.subr.mxu0 0.0
  %48 = vmatpush1.msra.mxu0 0.0
  %49 = vmatprep.subr.mxu0 0.0
  %50 = vmatpush1.msra.mxu0 0.0
  %51 = vmatprep.subr.mxu0 0.0
  %52 = vmatpush1.msra.mxu0 0.0
  %53 = vmatprep.subr.mxu0 0.0
  %54 = vmatpush1.msra.mxu0 0.0
  %55 = vmatprep.subr.mxu0 0.0
  %56 = vmatpush1.msra.mxu0 0.0
  %57 = vmatprep.subr.mxu0 0.0
  %58 = vmatpush1.msra.mxu0 0.0
  %59 = vmatprep.subr.mxu0 0.0
  %60 = vmatpush1.msra.mxu0 0.0
  %61 = vmatprep.subr.mxu0 0.0
  %62 = vmatpush1.msra.mxu0 %v31
  %63 = vmatprep.subr.mxu0 0.0
  %64 = vmatpush1.msra.mxu0 %v17
  %65 = vmatprep.subr.mxu0 0.0
  %66 = vmatpush2.msra.mxu0 0.0
  %67 = vmatprep.subr.mxu0 0.0
  %68 = vmatpush2.msra.mxu0 0.0
  %69 = vmatprep.subr.mxu0 0.0
  %70 = vmatpush2.msra.mxu0 0.0
  %71 = vmatprep.subr.mxu0 0.0
  %72 = vmatpush2.msra.mxu0 0.0
  %73 = vmatprep.subr.mxu0 0.0
  %74 = vmatpush2.msra.mxu0 0.0
  %75 = vmatprep.subr.mxu0 0.0
  %76 = vmatpush2.msra.mxu0 0.0
  %77 = vmatprep.subr.mxu0 0.0
  %78 = vmatpush2.msra.mxu0 0.0
  %79 = vmatprep.subr.mxu0 0.0
  %80 = vmatpush2.msra.mxu0 0.0
  %81 = vmatprep.subr.mxu0 0.0
  %82 = vmatpush2.msra.mxu0 0.0
  %83 = vmatprep.subr.mxu0 0.0
  %84 = vmatpush2.msra.mxu0 0.0
  %85 = vmatprep.subr.mxu0 0.0
  %86 = vmatpush2.msra.mxu0 0.0
  %87 = vmatprep.subr.mxu0 0.0
  %88 = vmatpush2.msra.mxu0 0.0
  %89 = vmatprep.subr.mxu0 0.0
  %90 = vmatpush2.msra.mxu0 0.0
  %91 = vmatprep.subr.mxu0 0.0
  %92 = vmatpush2.msra.mxu0 0.0
  %93 = vmatprep.subr.mxu0 0.0
  %94 = vmatpush2.msra.mxu0 0.0
  %95 = vmatprep.subr.mxu0 0.0
  %96 = vmatpush2.msra.mxu0 0.0
  %97 = vmatprep.mubr.f32.mxu0 0.0
  %98 = vmatmul.mubr.f32.gmra.mxu0 %v21
  %v99 = vpop.f32.mrf.mxu0
  %v100 = vadd.f32 0.0, %v99
  %v101 = vpop.f32.mrf.mxu0
  %102 = vmatprep.mubr.f32.mxu0 0.0
  %103 = vmatmul.mubr.f32.gmra.mxu0 %v24
  %v104 = vpop.f32.mrf.mxu0
  %v105 = vadd.f32 0.0, %v104
  %v106 = vpop.f32.mrf.mxu0
  %107 = vmatprep.mubr.f32.mxu0 0.0
  %108 = vmatmul.mubr.f32.gmra.mxu0 %v27
  %v109 = vpop.f32.mrf.mxu0
  %v110 = vadd.f32 0.0, %v109
  %v111 = vpop.f32.mrf.mxu0
  %112 = vdwg.mxu0
  %v113 = vld [vmem:[%s0] sm:$0xff]
  %v114 = vld [vmem:[%s0 + $0x8] sm:$0xff]
  %v115 = vld [vmem:[%s0 + $0x10] sm:$0xff]
  %v116 = vadd.f32 %v113, %v100
  %v117 = vadd.f32 %v114, %v105
  %v118 = vadd.f32 %v115, %v110
  %119 = vst.msk [vmem:[%s3] sm:$0xff] %vm19, %v116
  %120 = vst.msk [vmem:[%s3 + $0x8] sm:$0xff] %vm19, %v117
  %121 = vst.msk [vmem:[%s3 + $0x10] sm:$0xff] %vm19, %v118
  // Predicated region
  $region14: #{tpu_custom_call.1} parent=0 // pred_check
    _
  $region15: #{tpu_custom_call.1} parent=0 // pred_check_branch
    %123 = sbr.rel (0) target = $region17
  $region16: #{tpu_custom_call.1} parent=0 // pred_region
    _
  $region17: #{tpu_custom_call.1} parent=0 // pred_fallthru
    _
  // Predicated region
  $region18: #{tpu_custom_call.1} parent=0 // pred_check
    _
  $region19: #{tpu_custom_call.1} parent=0 // pred_check_branch
    %125 = sbr.rel (0) target = $region21
  $region20: #{tpu_custom_call.1} parent=0 // pred_region
    _
  $region21: #{tpu_custom_call.1} parent=0 // pred_fallthru
    _

</llo_original>
